<compile_context>
chip_gen: v7x
topology: tpu7x:2x2x1
jax: 0.10.0
libtpu: 0.0.40
codegen_flags: <defaults>
</compile_context>

<pallas_src>
import jax
import jax.numpy as jnp
from jax.experimental import pallas as pl
from jax.experimental.pallas import tpu as pltpu


def _round_up(x, m):
    return (x + m - 1) // m * m


def speaker_embed_kernel(labels_ref, table_ref, out_ref):
    """Embedding lookup for a 3-row vocab as a 2-way VPU select.

    labels_ref: (TILE_N, 1)     int32 VMEM
    table_ref : (V_pad, D_pad)  f32   VMEM   (row 0 is the zero padding row)
    out_ref   : (TILE_N, D_pad) f32   VMEM
    """
    labels = labels_ref[...]                      # (TILE_N, 1)
    table = table_ref[...]                        # (V_pad, D_pad)
    row1 = table[1:2, :]                          # (1, D_pad)
    row2 = table[2:3, :]                          # (1, D_pad)
    zero = jnp.zeros_like(row2)
    # label 0 (padding_idx) and padded/out-of-range labels -> zero rows.
    out_ref[...] = jnp.where(
        labels == 1, row1, jnp.where(labels == 2, row2, zero)
    )                                             # (TILE_N, D_pad)


def speaker_forward(speaker_labels, embed_table, *, tile_n=4096):
    """speaker_labels: (B, S) int; embed_table: (3, D) f32 -> (B, S, D) f32."""
    B, S = speaker_labels.shape
    V, D = embed_table.shape
    N = B * S

    D_pad = _round_up(max(D, 128), 128)
    V_pad = _round_up(max(V, 8), 8)
    tile_n = min(tile_n, _round_up(max(N, 8), 8))
    N_pad = _round_up(N, tile_n)
    grid_n = N_pad // tile_n

    # Single pad each (no dynamic-update-slice chains). Padded labels are 0,
    # which maps to the zero padding row.
    labels_pad = jnp.pad(
        speaker_labels.reshape(N).astype(jnp.int32), (0, N_pad - N)
    ).reshape(N_pad, 1)
    table_pad = jnp.pad(
        embed_table.astype(jnp.float32), ((0, V_pad - V), (0, D_pad - D))
    )

    cost = pl.CostEstimate(
        flops=4 * N_pad * D_pad,           # 2 cmp + 2 select per element
        transcendentals=0,
        bytes_accessed=4 * N_pad * (1 + D_pad) + 4 * V_pad * D_pad,
    )

    out_pad = pl.pallas_call(
        speaker_embed_kernel,
        out_shape=jax.ShapeDtypeStruct((N_pad, D_pad), jnp.float32),
        grid=(grid_n,),
        in_specs=[
            pl.BlockSpec((tile_n, 1), lambda i: (i, 0)),
            pl.BlockSpec((V_pad, D_pad), lambda i: (0, 0)),
        ],
        out_specs=pl.BlockSpec((tile_n, D_pad), lambda i: (i, 0)),
        compiler_params=pltpu.CompilerParams(
            dimension_semantics=("parallel",)),
        cost_estimate=cost,
    )(labels_pad, table_pad)

    # Match PyTorch output layout (B, S, speaker_dim). If the downstream
    # consumer can take the padded (N_pad, 128) slab, skip this slice.
    return out_pad[:N, :D].reshape(B, S, D)


def init_speaker_params(key, speaker_dim=20):
    """Deterministic init mirroring nn.Embedding(3, D, padding_idx=0):
    normal(0, 1) weights, with row 0 (padding_idx) zeroed.
    NOTE: padding_idx correctness relies on row 0 staying zero if the table
    is ever updated."""
    table = jax.random.normal(key, (3, speaker_dim), dtype=jnp.float32)
    table = table.at[0].set(0.0)
    return table


if __name__ == "__main__":
    key = jax.random.PRNGKey(0)
    k_table, k_labels = jax.random.split(key)

    speaker_dim = 20
    B, S = 2, 8

    embed_table = init_speaker_params(k_table, speaker_dim)
    speaker_labels = jax.random.randint(k_labels, (B, S), 0, 3, dtype=jnp.int32)

    out = speaker_forward(speaker_labels, embed_table)
    out = jax.block_until_ready(out)

    # sanity checks (pure-JAX reference): gather; padding_idx row is zero
    ref = jnp.take(embed_table, speaker_labels, axis=0)
    assert out.shape == (B, S, speaker_dim), out.shape
    assert jnp.allclose(out, ref, atol=1e-6), "mismatch vs reference gather"

    print("KERNEL_OK")
</pallas_src>

<mosaic_0001>
module attributes {stable_mosaic.version = 11 : i64} {
  func.func @speaker_embed_kernel(%arg0: i32, %arg1: memref<16x1xi32, #tpu.memory_space<vmem>>, %arg2: memref<8x128xf32, #tpu.memory_space<vmem>>, %arg3: memref<16x128xf32, #tpu.memory_space<vmem>>) attributes {dimension_semantics = [#tpu.dimension_semantics<parallel>], iteration_bounds = array<i64: 1>, scalar_prefetch = 0 : i64, scratch_operands = 0 : i64, tpu.core_type = #tpu.core_type<tc>, window_params = [{transform_indices = @transform_0, window_bounds = array<i64: 16, 1>}, {pipeline_mode = #tpu.pipeline_mode<synchronous>, transform_indices = @transform_1, window_bounds = array<i64: 8, 128>}, {transform_indices = @transform_2, window_bounds = array<i64: 16, 128>}]} {
    %c0 = arith.constant 0 : index
    %c0_0 = arith.constant 0 : index
    %0 = vector.load %arg1[%c0, %c0_0] : memref<16x1xi32, #tpu.memory_space<vmem>>, vector<16x1xi32>
    %c0_1 = arith.constant 0 : index
    %c0_2 = arith.constant 0 : index
    %1 = vector.load %arg2[%c0_1, %c0_2] : memref<8x128xf32, #tpu.memory_space<vmem>>, vector<8x128xf32>
    %2 = vector.extract_strided_slice %1 {offsets = [1, 0], sizes = [1, 128], strides = [1, 1]} : vector<8x128xf32> to vector<1x128xf32>
    %3 = vector.extract_strided_slice %1 {offsets = [2, 0], sizes = [1, 128], strides = [1, 1]} : vector<8x128xf32> to vector<1x128xf32>
    %cst = arith.constant 0.000000e+00 : f32
    %4 = vector.broadcast %cst : f32 to vector<1x128xf32>
    %c1_i32 = arith.constant 1 : i32
    %5 = vector.broadcast %c1_i32 : i32 to vector<16x1xi32>
    %6 = arith.cmpi eq, %0, %5 : vector<16x1xi32>
    %c2_i32 = arith.constant 2 : i32
    %7 = vector.broadcast %c2_i32 : i32 to vector<16x1xi32>
    %8 = arith.cmpi eq, %0, %7 : vector<16x1xi32>
    %9 = vector.shape_cast %8 : vector<16x1xi1> to vector<16x1xi1>
    %10 = vector.broadcast %9 : vector<16x1xi1> to vector<16x128xi1>
    %11 = vector.shape_cast %3 : vector<1x128xf32> to vector<1x128xf32>
    %12 = vector.broadcast %11 : vector<1x128xf32> to vector<16x128xf32>
    %13 = vector.shape_cast %4 : vector<1x128xf32> to vector<1x128xf32>
    %14 = vector.broadcast %13 : vector<1x128xf32> to vector<16x128xf32>
    %15 = arith.select %10, %12, %14 : vector<16x128xi1>, vector<16x128xf32>
    %16 = vector.shape_cast %6 : vector<16x1xi1> to vector<16x1xi1>
    %17 = vector.broadcast %16 : vector<16x1xi1> to vector<16x128xi1>
    %18 = vector.shape_cast %2 : vector<1x128xf32> to vector<1x128xf32>
    %19 = vector.broadcast %18 : vector<1x128xf32> to vector<16x128xf32>
    %20 = arith.select %17, %19, %15 : vector<16x128xi1>, vector<16x128xf32>
    %c0_3 = arith.constant 0 : index
    %c0_4 = arith.constant 0 : index
    %21 = vector.load %arg3[%c0_3, %c0_4] : memref<16x128xf32, #tpu.memory_space<vmem>>, vector<16x128xf32>
    tpu.vector_store %arg3[%c0_3, %c0_4], %20 {strides = array<i32>} : memref<16x128xf32, #tpu.memory_space<vmem>>, vector<16x128xf32>,
    return
  }
  func.func @transform_0(%arg0: i32) -> (i32, i32) {
    %c0_i32 = arith.constant 0 : i32
    %c0_i32_0 = arith.constant 0 : i32
    return %arg0, %c0_i32 : i32, i32
  }
  func.func @transform_1(%arg0: i32) -> (i32, i32) {
    %c0_i32 = arith.constant 0 : i32
    %c0_i32_0 = arith.constant 0 : i32
    %c0_i32_1 = arith.constant 0 : i32
    return %c0_i32, %c0_i32_0 : i32, i32
  }
  func.func @transform_2(%arg0: i32) -> (i32, i32) {
    %c0_i32 = arith.constant 0 : i32
    %c0_i32_0 = arith.constant 0 : i32
    return %arg0, %c0_i32 : i32, i32
  }
}

</mosaic_0001>

<llo_original>
// kernel: tpu_custom_call.1
$region0: #{tpu_custom_call.1}
  #allocation0 [shape = 'u32[]', space=smem, size = 0x4, offset = 0x4, fixed_abs, tag = 'smem constant byte address 0x4 - core index']
  #allocation1 [shape = 'u32[144,128]{1,0:T(1,128)}', space=vmem, size = 0x12000, scoped, tag = 'internal scratch']
  %s0 = inlined_call_operand.vmem [shape: s32[16,1], index: 0, kind: input, shape index: {}]
  %s1 = inlined_call_operand.vmem [shape: f32[8,128], index: 1, kind: input, shape index: {}]
  %s2 = inlined_call_operand.hbm [shape: f32[16,128], index: 2, kind: output, shape index: {}]
  %s3 = sld [smem:[#allocation0]]
  $region18: #{tpu_custom_call.1} parent=0
    _
  %s5 = ssub.s32 1, %s3
  %s6 = scalar_select 0, %s5, %s3
  $region1: #{tpu_custom_call.1} parent=0
    #allocation2 [shape = 'u8[8192]{0}', space=vmem, size = 0x2000, scoped, tag = 'output window, operand 0, single buffered']
    #allocation3 [shape = 's32[1]{0}', space=sflag, size = 0x4, scoped, tag = 'scoped memory for tpu_custom_call.1']
    %7 = vsyncpa [#allocation3], 0
    // Predicated region
    $region2: #{tpu_custom_call.1} parent=1 // pred_check
      _
    $region3: #{tpu_custom_call.1} parent=1 // pred_check_branch
      %9 = sbr.rel (0) target = $region5
    $region4: #{tpu_custom_call.1} parent=1 // pred_region
      _
    $region5: #{tpu_custom_call.1} parent=1 // pred_fallthru
      _
    // Predicated region
    $region6: #{tpu_custom_call.1} parent=1 // pred_check
      _
    $region7: #{tpu_custom_call.1} parent=1 // pred_check_branch
      %11 = sbr.rel (0) target = $region9
    $region8: #{tpu_custom_call.1} parent=1 // pred_region
      _
    $region9: #{tpu_custom_call.1} parent=1 // pred_fallthru
      _
    %v12 = vld [vmem:[%s0] sm:$0xff]
    %v13 = vld [vmem:[%s0 + $0x8] sm:$0xff]
    %v14 = vld [vmem:[%s1] sm:$0xff]
    %vm15 = vcmp.eq.s32.totalorder %v12, 1
    %vm16 = vcmp.eq.s32.totalorder %v13, 1
    %vm17 = vcmp.eq.s32.totalorder %v12, 2
    %vm18 = vcmp.eq.s32.totalorder %v13, 2
    %v19 = vsel %vm17, 1, 0
    %v20 = vsel %vm18, 1, 0
    %21 = vset.pattern.permute.xlu0 0
    %22 = vperm.xlu0 %21, %v19
    %v23 = vpop.permute.xlu0 %22
    %24 = vset.pattern.permute.xlu0 0
    %25 = vperm.xlu0 %24, %v20
    %v26 = vpop.permute.xlu0 %25
    %vm27 = vcmp.eq.s32.totalorder %v23, 1
    %vm28 = vcmp.eq.s32.totalorder %v26, 1
    %v29 = vlaneseq
    %v30 = vshrl.u32 %v29, 7
    %v31 = vsub.s32 2, %v30
    %v32 = vrot.slane %v14, %v31
    %v33 = vsel %vm27, %v32, 0.0
    %v34 = vsel %vm28, %v32, 0.0
    %v35 = vsel %vm15, 1, 0
    %v36 = vsel %vm16, 1, 0
    %37 = vset.pattern.permute.xlu0 0
    %38 = vperm.xlu0 %37, %v35
    %v39 = vpop.permute.xlu0 %38
    %40 = vset.pattern.permute.xlu0 0
    %41 = vperm.xlu0 %40, %v36
    %v42 = vpop.permute.xlu0 %41
    %vm43 = vcmp.eq.s32.totalorder %v39, 1
    %vm44 = vcmp.eq.s32.totalorder %v42, 1
    %v45 = vlaneseq
    %v46 = vshrl.u32 %v45, 7
    %v47 = vsub.s32 1, %v46
    %v48 = vrot.slane %v14, %v47
    %v49 = vsel %vm43, %v48, %v33
    %v50 = vsel %vm44, %v48, %v34
    %51 = vst [vmem:[#allocation2] sm:$0xff] %v49
    %52 = vst [vmem:[#allocation2 + $0x8] sm:$0xff] %v50
    // Predicated region
    $region10: #{tpu_custom_call.1} parent=1 // pred_check
      _
    $region11: #{tpu_custom_call.1} parent=1 // pred_check_branch
      %54 = sbr.rel (0) target = $region13
    $region12: #{tpu_custom_call.1} parent=1 // pred_region
      %s56 = ssub.s32 256, 256
      %57 = vsyncadd [#allocation3], %s56
      %s58 = sshll.u32 [#allocation2], 4
      %s59 = int_to_ptr.vmem [resolvable:$true] %s58
      %64 = dma.vmem_to_hbm [thread:$0]  %s59, 256, %s2, [#allocation3], 128, 128, 8
    $region13: #{tpu_custom_call.1} parent=1 // pred_fallthru
      _
    // Predicated region
    $region14: #{tpu_custom_call.1} parent=1 // pred_check
      _
    $region15: #{tpu_custom_call.1} parent=1 // pred_check_branch
      %66 = sbr.rel (0) target = $region17
    $region16: #{tpu_custom_call.1} parent=1 // pred_region
      %67 = dma.done [#allocation3], 256
    $region17: #{tpu_custom_call.1} parent=1 // pred_fallthru
      _
    %68 = vsyncpa [#allocation3], 1

</llo_original>
